<compile_context>
chip_gen: v7x
topology: tpu7x:2x2x1
jax: 0.10.0
libtpu: 0.0.40
codegen_flags: <defaults>
</compile_context>

<pallas_src>
import functools

import jax
import jax.numpy as jnp
import numpy as np
from jax.experimental import pallas as pl
from jax.experimental.pallas import tpu as pltpu


_VMEM_SOFT_CAP = 56 * 1024 * 1024   # below v7x's 64 MiB physical VMEM


def _round_up(x, m):
    return ((x + m - 1) // m) * m


# ----------------------------- Pallas kernels --------------------------------

def _mm_kernel_single_k(a_ref, w_ref, b_ref, o_ref, *, relu):
    """o = [relu](a @ w + b); whole reduction in one block (no scratch)."""
    out = jnp.dot(a_ref[...], w_ref[...], preferred_element_type=jnp.float32)
    out = out + b_ref[...]
    if relu:
        out = jnp.maximum(out, 0.0)
    o_ref[...] = out.astype(o_ref.dtype)


def _mm_kernel_multi_k(a_ref, w_ref, b_ref, o_ref, acc_ref, *, relu):
    """o = [relu](a @ w + b), tiled over (M, N, K); K is the reduction axis."""
    @pl.when(pl.program_id(2) == 0)
    def _():
        acc_ref[...] = jnp.zeros_like(acc_ref)

    acc_ref[...] += jnp.dot(a_ref[...], w_ref[...],
                            preferred_element_type=jnp.float32)

    @pl.when(pl.program_id(2) == pl.num_programs(2) - 1)
    def _():
        out = acc_ref[...] + b_ref[...]
        if relu:
            out = jnp.maximum(out, 0.0)
        o_ref[...] = out.astype(o_ref.dtype)


def _adaptive_pool_kernel(p_ref, x_ref, o_ref):
    """Per-image exact adaptive average pool: o = P @ x, f32 accumulation."""
    x = x_ref[0].astype(jnp.float32)                        # (H*W, C)
    o_ref[0] = jnp.dot(p_ref[...], x, preferred_element_type=jnp.float32)


# --------------------------- Tiled matmul wrapper -----------------------------

def _pick_tm(mp, tm_cap):
    """Largest power-of-two-ish tile (multiple of 16) with <=12.5% M padding."""
    t = tm_cap
    while t > 16:
        if _round_up(mp, t) - mp <= max(mp // 8, 0):
            break
        t //= 2
    return t, _round_up(mp, t)


def pallas_matmul(a, w, bias=None, relu=False, *, out_dtype=jnp.float32,
                  tm_cap=512, tn_cap=1024, tk_cap=1024):
    """out = [relu](a @ w + bias) with bf16 MXU operands and f32 accumulation.

    a: (M, K), w: (K, N), bias: (N,) or None.  Avoids padding K/N to 128 by
    using full-extent (ragged) blocks; prefers a full-N weight block so the
    activation operand is streamed from HBM exactly once.
    """
    M, K = a.shape
    K2, N = w.shape
    assert K == K2

    # --- K tiling: single full-K block when it fits (no scratch, no 128 pad).
    if K <= tk_cap:
        Kp = _round_up(K, 16)
        tk = Kp
    else:
        Kp = _round_up(K, 128)
        tk = 128
        t = (tk_cap // 128) * 128
        while t >= 128:
            if Kp % t == 0:
                tk = t
                break
            t -= 128
    nk = Kp // tk

    # --- N tiling: take the whole N if the weight block is small (kills the
    #     A-operand refetch across the N grid axis); otherwise 128-multiples.
    if N <= tn_cap and tk * N * 2 <= 4 * 1024 * 1024:
        tn, Np = N, N
    else:
        tn = max(128, (min(tn_cap, _round_up(N, 128)) // 128) * 128)
        Np = _round_up(N, tn)

    # --- M tiling.
    Mp = _round_up(M, 16)
    tm, Mp = _pick_tm(Mp, tm_cap)

    # Guarantee >= 2 blocks on a parallel axis so both v7x TensorCores get work.
    if (Mp // tm) * (Np // tn) < 2 and Mp >= 32 and (Mp // 2) % 16 == 0:
        tm = Mp // 2

    gm, gn = Mp // tm, Np // tn

    # --- Operand prep: cast to bf16 only if needed; pad only if needed.
    a_p = a if a.dtype == jnp.bfloat16 else a.astype(jnp.bfloat16)
    if (Mp, Kp) != (M, K):
        a_p = jnp.pad(a_p, ((0, Mp - M), (0, Kp - K)))
    w_p = w if w.dtype == jnp.bfloat16 else w.astype(jnp.bfloat16)
    if (Kp, Np) != (K, N):
        w_p = jnp.pad(w_p, ((0, Kp - K), (0, Np - N)))
    b = jnp.zeros((N,), jnp.float32) if bias is None else bias.astype(jnp.float32)
    b_p = (jnp.pad(b, (0, Np - N)) if Np != N else b).reshape(1, Np)

    out_itemsize = jnp.dtype(out_dtype).itemsize
    est = 2 * (tm * tk * 2 + tk * tn * 2 + tn * 4) + 2 * tm * tn * out_itemsize
    if nk > 1:
        est += tm * tn * 4
    vmem_limit = int(min(max(32 * 1024 * 1024, 2 * est), _VMEM_SOFT_CAP))

    if nk == 1:
        grid = (gm, gn)
        kernel = functools.partial(_mm_kernel_single_k, relu=relu)
        in_specs = [
            pl.BlockSpec((tm, tk), lambda i, j: (i, 0)),
            pl.BlockSpec((tk, tn), lambda i, j: (0, j)),
            pl.BlockSpec((1, tn), lambda i, j: (0, j)),
        ]
        out_specs = pl.BlockSpec((tm, tn), lambda i, j: (i, j))
        scratch = []
        dims = ("parallel", "parallel")
    else:
        grid = (gm, gn, nk)
        kernel = functools.partial(_mm_kernel_multi_k, relu=relu)
        in_specs = [
            pl.BlockSpec((tm, tk), lambda i, j, k: (i, k)),
            pl.BlockSpec((tk, tn), lambda i, j, k: (k, j)),
            pl.BlockSpec((1, tn), lambda i, j, k: (0, j)),
        ]
        out_specs = pl.BlockSpec((tm, tn), lambda i, j, k: (i, j))
        scratch = [pltpu.VMEM((tm, tn), jnp.float32)]
        dims = ("parallel", "parallel", "arbitrary")

    out_p = pl.pallas_call(
        kernel,
        out_shape=jax.ShapeDtypeStruct((Mp, Np), out_dtype),
        grid_spec=pltpu.PrefetchScalarGridSpec(
            num_scalar_prefetch=0,
            grid=grid,
            in_specs=in_specs,
            out_specs=out_specs,
            scratch_shapes=scratch,
        ),
        compiler_params=pltpu.CompilerParams(
            dimension_semantics=dims,
            vmem_limit_bytes=vmem_limit),
        cost_estimate=pl.CostEstimate(
            flops=2 * Mp * Np * Kp,
            transcendentals=0,
            # Account for A refetch across N blocks and W refetch across M blocks.
            bytes_accessed=(gn * Mp * Kp * 2 + gm * Kp * Np * 2
                            + gm * Np * 4 + Mp * Np * out_itemsize)),
    )(a_p, w_p, b_p)

    if (Mp, Np) != (M, N):
        out_p = out_p[:M, :N]
    return out_p


# ------------------------------- Glue (JAX) ---------------------------------

def im2col_nhwc(x, kh, kw, stride, pad):
    """x: (N, H, W, C) -> cols: (N*OH*OW, kh*kw*C), (kh,kw)-major, C-minor."""
    # TODO(synk): fuse the tap accumulation into the matmul kernel's f32 scratch
    # to avoid materializing the kh*kw-times-larger cols array in HBM.
    N, H, W, C = x.shape
    xp = jnp.pad(x, ((0, 0), (pad, pad), (pad, pad), (0, 0)))
    OH = (H + 2 * pad - kh) // stride + 1
    OW = (W + 2 * pad - kw) // stride + 1
    patches = []
    for i in range(kh):
        for j in range(kw):
            patches.append(
                xp[:, i: i + stride * OH: stride, j: j + stride * OW: stride, :])
    cols = jnp.concatenate(patches, axis=-1)        # (N, OH, OW, kh*kw*C)
    return cols.reshape(N * OH * OW, kh * kw * C), OH, OW


def conv2d_relu_nhwc(x, w, b, stride, pad):
    """x: (N,H,W,Cin) NHWC bf16, w: (Cout,Cin,kh,kw) PyTorch layout, b: (Cout,)."""
    N = x.shape[0]
    Cout, Cin, kh, kw = w.shape
    cols, OH, OW = im2col_nhwc(x, kh, kw, stride, pad)          # bf16 cols
    # Reorder weight to (kh, kw, Cin, Cout) to match the im2col patch ordering.
    wmat = jnp.transpose(w, (2, 3, 1, 0)).reshape(kh * kw * Cin, Cout)
    out = pallas_matmul(cols, wmat.astype(jnp.bfloat16), bias=b, relu=True,
                        out_dtype=jnp.bfloat16)                 # (N*OH*OW, Cout)
    return out.reshape(N, OH, OW, Cout)


def adaptive_pool_matrix(H, W, E):
    """Exact AdaptiveAvgPool2d((E,E)) as a (E*E, H*W) averaging matrix."""
    P = np.zeros((E * E, H * W), dtype=np.float32)
    for oi in range(E):
        hs = (oi * H) // E
        he = -((-(oi + 1) * H) // E)     # ceil((oi+1)*H / E)
        for oj in range(E):
            ws = (oj * W) // E
            we = -((-(oj + 1) * W) // E)
            cnt = (he - hs) * (we - ws)
            for ih in range(hs, he):
                for iw in range(ws, we):
                    P[oi * E + oj, ih * W + iw] = 1.0 / cnt
    return jnp.asarray(P)


def adaptive_avg_pool_nhwc(x, E):
    """x: (N,H,W,C) bf16 -> (N,E,E,C) f32, == AdaptiveAvgPool2d + permute(0,2,3,1).

    Per-image Pallas matmul; no HBM transpose, no padding (all blocks use full
    last-two-dim extents), f32 accumulation for the pooling average.
    """
    N, H, W, C = x.shape
    P = adaptive_pool_matrix(H, W, E)                 # (E*E, H*W) f32
    x2 = x.reshape(N, H * W, C)                       # contiguous reshape (free)
    E2, HW = E * E, H * W
    out = pl.pallas_call(
        _adaptive_pool_kernel,
        out_shape=jax.ShapeDtypeStruct((N, E2, C), jnp.float32),
        grid_spec=pltpu.PrefetchScalarGridSpec(
            num_scalar_prefetch=0,
            grid=(N,),
            in_specs=[
                pl.BlockSpec((E2, HW), lambda n: (0, 0)),
                pl.BlockSpec((1, HW, C), lambda n: (n, 0, 0)),
            ],
            out_specs=pl.BlockSpec((1, E2, C), lambda n: (n, 0, 0)),
        ),
        compiler_params=pltpu.CompilerParams(
            dimension_semantics=("parallel",)),
    )(P, x2)
    return out.reshape(N, E, E, C)


def encoder_cnn_forward(images_nchw, weights, *, layer_cfg, encoded_image_size):
    """images: (N, C, H, W) NCHW f32. Returns (N, E, E, C_feat) NHWC f32."""
    # NCHW -> NHWC once; f32 -> bf16 once; activations stay bf16 between layers.
    x = jnp.transpose(images_nchw, (0, 2, 3, 1)).astype(jnp.bfloat16)
    for (w, b), (stride, pad) in zip(weights, layer_cfg):
        x = conv2d_relu_nhwc(x, w, b, stride, pad)
    # AdaptiveAvgPool2d((E,E)) followed by permute(0,2,3,1); final output f32.
    return adaptive_avg_pool_nhwc(x, encoded_image_size)


# --------------------------------- Main --------------------------------------

if __name__ == "__main__":
    key = jax.random.PRNGKey(0)
    k_img, k_w1, k_b1, k_w2, k_b2 = jax.random.split(key, 5)

    # Small shapes: batch=2, in-channels=3, spatial=16x16, encoded_image_size=4.
    N, Cin, H, W = 2, 3, 16, 16
    encoded_image_size = 4

    images = jax.random.normal(k_img, (N, Cin, H, W), dtype=jnp.float32)

    # Deterministic stand-in backbone parameters:
    #   conv1: 3 -> 16, 3x3, stride 2, pad 1, ReLU
    #   conv2: 16 -> 32, 3x3, stride 1, pad 1, ReLU
    w1 = 0.1 * jax.random.normal(k_w1, (16, 3, 3, 3), dtype=jnp.float32)
    b1 = 0.1 * jax.random.normal(k_b1, (16,), dtype=jnp.float32)
    w2 = 0.1 * jax.random.normal(k_w2, (32, 16, 3, 3), dtype=jnp.float32)
    b2 = 0.1 * jax.random.normal(k_b2, (32,), dtype=jnp.float32)

    weights = [(w1, b1), (w2, b2)]          # traced pytree: arrays only
    layer_cfg = ((2, 1), (1, 1))            # static (stride, pad) per layer

    fwd = jax.jit(functools.partial(encoder_cnn_forward,
                                    layer_cfg=layer_cfg,
                                    encoded_image_size=encoded_image_size))
    out = fwd(images, weights)
    out = jax.block_until_ready(out)

    assert out.shape == (N, encoded_image_size, encoded_image_size, 32), out.shape
    assert out.dtype == jnp.float32
    assert bool(jnp.all(jnp.isfinite(out)))
    print("KERNEL_OK")
</pallas_src>

<mosaic_0001>
module attributes {stable_mosaic.version = 11 : i64} {
  func.func @_mm_kernel_single_k(%arg0: i32, %arg1: i32, %arg2: memref<64x32xbf16, #tpu.memory_space<vmem>>, %arg3: memref<32x16xbf16, #tpu.memory_space<vmem>>, %arg4: memref<1x16xf32, #tpu.memory_space<vmem>>, %arg5: memref<64x16xbf16, #tpu.memory_space<vmem>>) attributes {dimension_semantics = [#tpu.dimension_semantics<parallel>, #tpu.dimension_semantics<parallel>], iteration_bounds = array<i64: 2, 1>, scalar_prefetch = 0 : i64, scratch_operands = 0 : i64, tpu.core_type = #tpu.core_type<tc>, window_params = [{transform_indices = @transform_0, window_bounds = array<i64: 64, 32>}, {transform_indices = @transform_1, window_bounds = array<i64: 32, 16>}, {transform_indices = @transform_2, window_bounds = array<i64: 1, 16>}, {transform_indices = @transform_3, window_bounds = array<i64: 64, 16>}]} {
    %c0 = arith.constant 0 : index
    %c0_0 = arith.constant 0 : index
    %0 = vector.load %arg2[%c0, %c0_0] : memref<64x32xbf16, #tpu.memory_space<vmem>>, vector<64x32xbf16>
    %c0_1 = arith.constant 0 : index
    %c0_2 = arith.constant 0 : index
    %1 = vector.load %arg3[%c0_1, %c0_2] : memref<32x16xbf16, #tpu.memory_space<vmem>>, vector<32x16xbf16>
    %cst = arith.constant dense<0.000000e+00> : vector<64x16xf32>
    %2 = tpu.matmul %0, %1, %cst {dimension_numbers = #tpu.dot_dimension_numbers<[1], [0], [0], [1], [0, 0, 1, 1], [], []>} : vector<64x32xbf16>, vector<32x16xbf16>, vector<64x16xf32> -> vector<64x16xf32>
    %c0_3 = arith.constant 0 : index
    %c0_4 = arith.constant 0 : index
    %3 = vector.load %arg4[%c0_3, %c0_4] : memref<1x16xf32, #tpu.memory_space<vmem>>, vector<1x16xf32>
    %4 = vector.broadcast %3 : vector<1x16xf32> to vector<64x16xf32>
    %5 = arith.addf %2, %4 : vector<64x16xf32>
    %cst_5 = arith.constant 0.000000e+00 : f32
    %6 = vector.broadcast %cst_5 : f32 to vector<64x16xf32>
    %7 = arith.maximumf %5, %6 : vector<64x16xf32>
    %8 = arith.truncf %7 : vector<64x16xf32> to vector<64x16xbf16>
    %c0_6 = arith.constant 0 : index
    %c0_7 = arith.constant 0 : index
    %9 = vector.load %arg5[%c0_6, %c0_7] : memref<64x16xbf16, #tpu.memory_space<vmem>>, vector<64x16xbf16>
    tpu.vector_store %arg5[%c0_6, %c0_7], %8 {strides = array<i32>} : memref<64x16xbf16, #tpu.memory_space<vmem>>, vector<64x16xbf16>,
    return
  }
  func.func @transform_0(%arg0: i32, %arg1: i32) -> (i32, i32) {
    %c0_i32 = arith.constant 0 : i32
    %c0_i32_0 = arith.constant 0 : i32
    return %arg0, %c0_i32 : i32, i32
  }
  func.func @transform_1(%arg0: i32, %arg1: i32) -> (i32, i32) {
    %c0_i32 = arith.constant 0 : i32
    %c0_i32_0 = arith.constant 0 : i32
    return %c0_i32, %arg1 : i32, i32
  }
  func.func @transform_2(%arg0: i32, %arg1: i32) -> (i32, i32) {
    %c0_i32 = arith.constant 0 : i32
    %c0_i32_0 = arith.constant 0 : i32
    return %c0_i32, %arg1 : i32, i32
  }
  func.func @transform_3(%arg0: i32, %arg1: i32) -> (i32, i32) {
    %c0_i32 = arith.constant 0 : i32
    return %arg0, %arg1 : i32, i32
  }
}

module attributes {stable_mosaic.version = 11 : i64} {
  func.func @_mm_kernel_single_k(%arg0: i32, %arg1: i32, %arg2: memref<64x144xbf16, #tpu.memory_space<vmem>>, %arg3: memref<144x32xbf16, #tpu.memory_space<vmem>>, %arg4: memref<1x32xf32, #tpu.memory_space<vmem>>, %arg5: memref<64x32xbf16, #tpu.memory_space<vmem>>) attributes {dimension_semantics = [#tpu.dimension_semantics<parallel>, #tpu.dimension_semantics<parallel>], iteration_bounds = array<i64: 2, 1>, scalar_prefetch = 0 : i64, scratch_operands = 0 : i64, tpu.core_type = #tpu.core_type<tc>, window_params = [{transform_indices = @transform_0, window_bounds = array<i64: 64, 144>}, {transform_indices = @transform_1, window_bounds = array<i64: 144, 32>}, {transform_indices = @transform_2, window_bounds = array<i64: 1, 32>}, {transform_indices = @transform_3, window_bounds = array<i64: 64, 32>}]} {
    %c0 = arith.constant 0 : index
    %c0_0 = arith.constant 0 : index
    %0 = vector.load %arg2[%c0, %c0_0] : memref<64x144xbf16, #tpu.memory_space<vmem>>, vector<64x144xbf16>
    %c0_1 = arith.constant 0 : index
    %c0_2 = arith.constant 0 : index
    %1 = vector.load %arg3[%c0_1, %c0_2] : memref<144x32xbf16, #tpu.memory_space<vmem>>, vector<144x32xbf16>
    %cst = arith.constant dense<0.000000e+00> : vector<64x32xf32>
    %2 = tpu.matmul %0, %1, %cst {dimension_numbers = #tpu.dot_dimension_numbers<[1], [0], [0], [1], [0, 0, 1, 1], [], []>} : vector<64x144xbf16>, vector<144x32xbf16>, vector<64x32xf32> -> vector<64x32xf32>
    %c0_3 = arith.constant 0 : index
    %c0_4 = arith.constant 0 : index
    %3 = vector.load %arg4[%c0_3, %c0_4] : memref<1x32xf32, #tpu.memory_space<vmem>>, vector<1x32xf32>
    %4 = vector.broadcast %3 : vector<1x32xf32> to vector<64x32xf32>
    %5 = arith.addf %2, %4 : vector<64x32xf32>
    %cst_5 = arith.constant 0.000000e+00 : f32
    %6 = vector.broadcast %cst_5 : f32 to vector<64x32xf32>
    %7 = arith.maximumf %5, %6 : vector<64x32xf32>
    %8 = arith.truncf %7 : vector<64x32xf32> to vector<64x32xbf16>
    %c0_6 = arith.constant 0 : index
    %c0_7 = arith.constant 0 : index
    %9 = vector.load %arg5[%c0_6, %c0_7] : memref<64x32xbf16, #tpu.memory_space<vmem>>, vector<64x32xbf16>
    tpu.vector_store %arg5[%c0_6, %c0_7], %8 {strides = array<i32>} : memref<64x32xbf16, #tpu.memory_space<vmem>>, vector<64x32xbf16>,
    return
  }
  func.func @transform_0(%arg0: i32, %arg1: i32) -> (i32, i32) {
    %c0_i32 = arith.constant 0 : i32
    %c0_i32_0 = arith.constant 0 : i32
    return %arg0, %c0_i32 : i32, i32
  }
  func.func @transform_1(%arg0: i32, %arg1: i32) -> (i32, i32) {
    %c0_i32 = arith.constant 0 : i32
    %c0_i32_0 = arith.constant 0 : i32
    return %c0_i32, %arg1 : i32, i32
  }
  func.func @transform_2(%arg0: i32, %arg1: i32) -> (i32, i32) {
    %c0_i32 = arith.constant 0 : i32
    %c0_i32_0 = arith.constant 0 : i32
    return %c0_i32, %arg1 : i32, i32
  }
  func.func @transform_3(%arg0: i32, %arg1: i32) -> (i32, i32) {
    %c0_i32 = arith.constant 0 : i32
    return %arg0, %arg1 : i32, i32
  }
}

module attributes {stable_mosaic.version = 11 : i64} {
  func.func @_adaptive_pool_kernel(%arg0: i32, %arg1: memref<16x64xf32, #tpu.memory_space<vmem>>, %arg2: memref<1x64x32xbf16, #tpu.memory_space<vmem>>, %arg3: memref<1x16x32xf32, #tpu.memory_space<vmem>>) attributes {dimension_semantics = [#tpu.dimension_semantics<parallel>], iteration_bounds = array<i64: 2>, scalar_prefetch = 0 : i64, scratch_operands = 0 : i64, tpu.core_type = #tpu.core_type<tc>, window_params = [{pipeline_mode = #tpu.pipeline_mode<synchronous>, transform_indices = @transform_0, window_bounds = array<i64: 16, 64>}, {transform_indices = @transform_1, window_bounds = array<i64: 1, 64, 32>}, {transform_indices = @transform_2, window_bounds = array<i64: 1, 16, 32>}]} {
    %c0 = arith.constant 0 : index
    %c0_0 = arith.constant 0 : index
    %c0_1 = arith.constant 0 : index
    %0 = vector.load %arg2[%c0, %c0_0, %c0_1] : memref<1x64x32xbf16, #tpu.memory_space<vmem>>, vector<1x64x32xbf16>
    %1 = vector.shape_cast %0 : vector<1x64x32xbf16> to vector<64x32xbf16>
    %2 = arith.extf %1 : vector<64x32xbf16> to vector<64x32xf32>
    %c0_2 = arith.constant 0 : index
    %c0_3 = arith.constant 0 : index
    %3 = vector.load %arg1[%c0_2, %c0_3] : memref<16x64xf32, #tpu.memory_space<vmem>>, vector<16x64xf32>
    %cst = arith.constant dense<0.000000e+00> : vector<16x32xf32>
    %4 = tpu.matmul %3, %2, %cst {dimension_numbers = #tpu.dot_dimension_numbers<[1], [0], [0], [1], [0, 0, 1, 1], [], []>} : vector<16x64xf32>, vector<64x32xf32>, vector<16x32xf32> -> vector<16x32xf32>
    %c0_4 = arith.constant 0 : index
    %c0_5 = arith.constant 0 : index
    %c0_6 = arith.constant 0 : index
    %5 = vector.load %arg3[%c0_4, %c0_5, %c0_6] : memref<1x16x32xf32, #tpu.memory_space<vmem>>, vector<1x16x32xf32>
    %6 = vector.shape_cast %5 : vector<1x16x32xf32> to vector<16x32xf32>
    %7 = vector.shape_cast %4 : vector<16x32xf32> to vector<1x16x32xf32>
    tpu.vector_store %arg3[%c0_4, %c0_5, %c0_6], %7 {strides = array<i32>} : memref<1x16x32xf32, #tpu.memory_space<vmem>>, vector<1x16x32xf32>,
    return
  }
  func.func @transform_0(%arg0: i32) -> (i32, i32) {
    %c0_i32 = arith.constant 0 : i32
    %c0_i32_0 = arith.constant 0 : i32
    %c0_i32_1 = arith.constant 0 : i32
    return %c0_i32, %c0_i32_0 : i32, i32
  }
  func.func @transform_1(%arg0: i32) -> (i32, i32, i32) {
    %c0_i32 = arith.constant 0 : i32
    %c0_i32_0 = arith.constant 0 : i32
    %c0_i32_1 = arith.constant 0 : i32
    return %arg0, %c0_i32, %c0_i32_0 : i32, i32, i32
  }
  func.func @transform_2(%arg0: i32) -> (i32, i32, i32) {
    %c0_i32 = arith.constant 0 : i32
    %c0_i32_0 = arith.constant 0 : i32
    %c0_i32_1 = arith.constant 0 : i32
    return %arg0, %c0_i32, %c0_i32_0 : i32, i32, i32
  }
}

</mosaic_0001>

<llo_original>
// kernel: encoder_cnn_forward.3
$region0: #{encoder_cnn_forward.3}
  #allocation0 [shape = 'u32[]', space=smem, size = 0x4, offset = 0x4, fixed_abs, tag = 'smem constant byte address 0x4 - core index']
  #allocation1 [shape = 'u32[144,128]{1,0:T(1,128)}', space=vmem, size = 0x12000, scoped, tag = 'internal scratch']
  %s0 = inlined_call_operand.vmem [shape: bf16[128,32], index: 0, kind: input, shape index: {}]
  %s1 = inlined_call_operand.vmem [shape: bf16[32,16], index: 1, kind: input, shape index: {}]
  %s2 = inlined_call_operand.vmem [shape: f32[1,16], index: 2, kind: input, shape index: {}]
  %s3 = inlined_call_operand.vmem [shape: bf16[128,16], index: 3, kind: output, shape index: {}]
  %s4 = sld [smem:[#allocation0]]
  $region45: #{encoder_cnn_forward.3} parent=0
    _
  %s6 = ssub.s32 1, %s4
  %s7 = scalar_select 0, %s6, %s4
  loop: start=0, step=1, limit=4
  $region2: #{encoder_cnn_forward.3} parent=0 // loop_pre_header
    _
  $region3: #{encoder_cnn_forward.3} parent=0 // loop_header
    %s9 = sphi 0, %s13
    %p10 = scmp.ge.s32.totalorder %s9, 4
    %s16 = sphi 0, %s28
    %s17 = sphi 0, %s24
    %s18 = sphi 0, %s16
    %s19 = sphi 0, %s17
    %s20 = sphi 0, %s18
    %s21 = sphi 0, %s19
    %s31 = sphi 0, %s33
    %s34 = sphi 0, %s31
    %s35 = sphi 0, %s34
    %s51 = sphi 0, %s35
    %s57 = sphi 0, %s59
    %s60 = sphi 0, %s57
    %s61 = sphi 0, %s60
    %s77 = sphi 0, %s61
    %s83 = sphi 0, %s85
    %s86 = sphi 0, %s83
    %s87 = sphi 0, %s86
    %s103 = sphi 0, %s87
    %s111 = sphi 0, %s113
    %s114 = sphi 0, %s111
    %s115 = sphi 0, %s114
    %s131 = sphi 0, %s115
  $region4: #{encoder_cnn_forward.3} parent=0 // loop_header_branch
    %12 = sbr.rel (%p10) target = $region8
  $region5: #{encoder_cnn_forward.3} parent=0 // loop_body
    %s14 = ssub.s32 %s9, 1
    %s15 = ssub.s32 %s9, 2
    %s22 = sadd.s32 1, %s17
    %p23 = scmp.ge.s32.totalorder %s22, 1
    %s24 = scalar_select %p23, 0, %s22
    %s25 = sadd.s32 1, %s16
    %s26 = scalar_select %p23, %s25, %s16
    %p27 = scmp.ge.s32.totalorder %s26, 2
    %s28 = scalar_select %p27, 0, %s26
    %s29 = ssub.s32 %s16, %s28
    %p30 = scmp.eq.s32.totalorder %s29, 0
    %s32 = sadd.s32 %s31, 1
    %s33 = scalar_select %p30, %s31, %s32
    %p36 = pneg %p30
    %p37 = scmp.eq.s32.totalorder %s9, 1
    %p38 = por %p36, %p37
    %p39 = scmp.ne.s32.totalorder %s31, %s34
    %p40 = scmp.eq.s32.totalorder %s9, 0
    %p41 = por %p39, %p40
    %p42 = scmp.ne.s32.totalorder %s31, %s34
    %p43 = scmp.eq.s32.totalorder %s14, 1
    %p44 = por %p42, %p43
    %p45 = scmp.ne.s32.totalorder %s34, %s35
    %p46 = scmp.eq.s32.totalorder %s14, 0
    %p47 = por %p45, %p46
    %p48 = scmp.ne.s32.totalorder %s34, %s35
    %p49 = scmp.eq.s32.totalorder %s15, 1
    %p50 = por %p48, %p49
    %p52 = scmp.ne.s32.totalorder %s35, %s51
    %p53 = scmp.eq.s32.totalorder %s15, 0
    %p54 = por %p52, %p53
    %s55 = ssub.s32 %s17, %s24
    %p56 = scmp.eq.s32.totalorder %s55, 0
    %s58 = sadd.s32 %s57, 1
    %s59 = scalar_select %p56, %s57, %s58
    %p62 = pneg %p56
    %p63 = scmp.eq.s32.totalorder %s9, 1
    %p64 = por %p62, %p63
    %p65 = scmp.ne.s32.totalorder %s57, %s60
    %p66 = scmp.eq.s32.totalorder %s9, 0
    %p67 = por %p65, %p66
    %p68 = scmp.ne.s32.totalorder %s57, %s60
    %p69 = scmp.eq.s32.totalorder %s14, 1
    %p70 = por %p68, %p69
    %p71 = scmp.ne.s32.totalorder %s60, %s61
    %p72 = scmp.eq.s32.totalorder %s14, 0
    %p73 = por %p71, %p72
    %p74 = scmp.ne.s32.totalorder %s60, %s61
    %p75 = scmp.eq.s32.totalorder %s15, 1
    %p76 = por %p74, %p75
    %p78 = scmp.ne.s32.totalorder %s61, %s77
    %p79 = scmp.eq.s32.totalorder %s15, 0
    %p80 = por %p78, %p79
    %s81 = ssub.s32 %s17, %s24
    %p82 = scmp.eq.s32.totalorder %s81, 0
    %s84 = sadd.s32 %s83, 1
    %s85 = scalar_select %p82, %s83, %s84
    %p88 = pneg %p82
    %p89 = scmp.eq.s32.totalorder %s9, 1
    %p90 = por %p88, %p89
    %p91 = scmp.ne.s32.totalorder %s83, %s86
    %p92 = scmp.eq.s32.totalorder %s9, 0
    %p93 = por %p91, %p92
    %p94 = scmp.ne.s32.totalorder %s83, %s86
    %p95 = scmp.eq.s32.totalorder %s14, 1
    %p96 = por %p94, %p95
    %p97 = scmp.ne.s32.totalorder %s86, %s87
    %p98 = scmp.eq.s32.totalorder %s14, 0
    %p99 = por %p97, %p98
    %p100 = scmp.ne.s32.totalorder %s86, %s87
    %p101 = scmp.eq.s32.totalorder %s15, 1
    %p102 = por %p100, %p101
    %p104 = scmp.ne.s32.totalorder %s87, %s103
    %p105 = scmp.eq.s32.totalorder %s15, 0
    %p106 = por %p104, %p105
    %s107 = ssub.s32 %s16, %s28
    %s108 = ssub.s32 %s17, %s24
    %s109 = sor.u32 %s107, %s108
    %p110 = scmp.eq.s32.totalorder %s109, 0
    %s112 = sadd.s32 %s111, 1
    %s113 = scalar_select %p110, %s111, %s112
    %p116 = pneg %p110
    %p117 = scmp.eq.s32.totalorder %s9, 1
    %p118 = por %p116, %p117
    %p119 = scmp.ne.s32.totalorder %s111, %s114
    %p120 = scmp.eq.s32.totalorder %s9, 0
    %p121 = por %p119, %p120
    %p122 = scmp.ne.s32.totalorder %s111, %s114
    %p123 = scmp.eq.s32.totalorder %s14, 1
    %p124 = por %p122, %p123
    %p125 = scmp.ne.s32.totalorder %s114, %s115
    %p126 = scmp.eq.s32.totalorder %s14, 0
    %p127 = por %p125, %p126
    %p128 = scmp.ne.s32.totalorder %s114, %s115
    %p129 = scmp.eq.s32.totalorder %s15, 1
    %p130 = por %p128, %p129
    %p132 = scmp.ne.s32.totalorder %s115, %s131
    %p133 = scmp.eq.s32.totalorder %s15, 0
    %p134 = por %p132, %p133
    %p135 = scmp.le.s32.totalorder 1, %s9
    %p136 = scmp.lt.s32.totalorder %s9, 3
    %p137 = pnand %p135, %p136
    %p138 = pneg %p137
    // Predicated region
    $region9: #{encoder_cnn_forward.3} parent=5 // pred_check
      _
    $region10: #{encoder_cnn_forward.3} parent=5 // pred_check_branch
      %140 = sbr.rel (%p137) target = $region12
    $region11: #{encoder_cnn_forward.3} parent=5 // pred_region
      %s141 = ssub.s32 %s9, 1
      // Predicated region
      $region13: #{encoder_cnn_forward.3} parent=11 // pred_check
        %p142 = pneg %p73
      $region14: #{encoder_cnn_forward.3} parent=11 // pred_check_branch
        %144 = sbr.rel (%p142) target = $region16
      $region15: #{encoder_cnn_forward.3} parent=11 // pred_region
        %p145 = scmp.lt.s32.totalorder %s19, 0
        %s146 = scalar_select %p145, %s19, 0
        %s147 = smul.addr %s146, 4
        %s148 = scalar_lea.vmem %s1, %s147
      $region16: #{encoder_cnn_forward.3} parent=11 // pred_fallthru
        _
      // Predicated region
      $region17: #{encoder_cnn_forward.3} parent=11 // pred_check
        %p149 = pneg %p99
      $region18: #{encoder_cnn_forward.3} parent=11 // pred_check_branch
        %151 = sbr.rel (%p149) target = $region20
      $region19: #{encoder_cnn_forward.3} parent=11 // pred_region
        %p152 = scmp.lt.s32.totalorder %s19, 0
        %s153 = scalar_select %p152, %s19, 0
        %s154 = scalar_lea.vmem %s2, %s153
      $region20: #{encoder_cnn_forward.3} parent=11 // pred_fallthru
        _
    $region12: #{encoder_cnn_forward.3} parent=5 // pred_fallthru
      _
    %p155 = scmp.lt.s32.totalorder %s9, 2
    // Predicated region
    $region21: #{encoder_cnn_forward.3} parent=5 // pred_check
      %p156 = pneg %p155
    $region22: #{encoder_cnn_forward.3} parent=5 // pred_check_branch
      %158 = sbr.rel (%p156) target = $region24
    $region23: #{encoder_cnn_forward.3} parent=5 // pred_region
      // Predicated region
      $region25: #{encoder_cnn_forward.3} parent=23 // pred_check
        %p159 = pneg %p41
      $region26: #{encoder_cnn_forward.3} parent=23 // pred_check_branch
        %161 = sbr.rel (%p159) target = $region28
      $region27: #{encoder_cnn_forward.3} parent=23 // pred_region
        %s162 = smul.u32 8, %s16
        %p163 = scmp.lt.s32.totalorder %s162, 15
        %s164 = scalar_select %p163, %s162, 15
        %s165 = smul.addr %s164, 4
        %s166 = scalar_lea.vmem %s0, %s165
        %s167 = smul.u32 8, %s16
      $region28: #{encoder_cnn_forward.3} parent=23 // pred_fallthru
        _
    $region24: #{encoder_cnn_forward.3} parent=5 // pred_fallthru
      _
    %p168 = scmp.le.s32.totalorder 1, %s9
    %p169 = scmp.lt.s32.totalorder %s9, 3
    %p170 = pnand %p168, %p169
    %p171 = pneg %p170
    // Predicated region
    $region29: #{encoder_cnn_forward.3} parent=5 // pred_check
      _
    $region30: #{encoder_cnn_forward.3} parent=5 // pred_check_branch
      %173 = sbr.rel (%p170) target = $region32
    $region31: #{encoder_cnn_forward.3} parent=5 // pred_region
      %s174 = ssub.s32 %s9, 1
      %s175 = smul.u32 8, %s18
      %p176 = scmp.lt.s32.totalorder %s175, 15
      %s177 = scalar_select %p176, %s175, 15
      %s178 = smul.addr %s177, 4
      %s179 = scalar_lea.vmem %s0, %s178
      %p180 = pneg %p47
      %p181 = pneg %p44
      %p182 = scmp.lt.s32.totalorder %s19, 0
      %s183 = scalar_select %p182, %s19, 0
      %s184 = smul.addr %s183, 4
      %s185 = scalar_lea.vmem %s1, %s184
      %p186 = pneg %p73
      %p187 = pneg %p70
      %p188 = scmp.lt.s32.totalorder %s19, 0
      %s189 = scalar_select %p188, %s19, 0
      %s190 = scalar_lea.vmem %s2, %s189
      %p191 = pneg %p99
      %p192 = pneg %p96
      %p193 = pneg %p127
      %p194 = pneg %p124
      %s195 = smul.u32 8, %s18
      %p196 = scmp.lt.s32.totalorder %s195, 15
      %s197 = scalar_select %p196, %s195, 15
      %p198 = scmp.lt.s32.totalorder %s19, 0
      %s199 = scalar_select %p198, %s19, 0
      %s200 = sadd.s32 %s199, %s197
      %s201 = smul.addr %s200, 4
      %s202 = scalar_lea.vmem %s3, %s201
      %s203 = smul.u32 8, %s18
      %p204 = scmp.lt.s32.totalorder %s203, 15
      %s205 = scalar_select %p204, %s203, 15
      %s206 = smul.addr %s205, 4
      %s207 = scalar_lea.vmem %s0, %s206
      %s208 = smul.u32 8, %s18
      %p209 = scmp.lt.s32.totalorder %s19, 0
      %s210 = scalar_select %p209, %s19, 0
      %s211 = smul.addr %s210, 4
      %s212 = scalar_lea.vmem %s1, %s211
      %p213 = scmp.lt.s32.totalorder %s19, 0
      %s214 = scalar_select %p213, %s19, 0
      %s215 = scalar_lea.vmem %s2, %s214
      %s216 = smul.u32 8, %s18
      %p217 = scmp.lt.s32.totalorder %s216, 15
      %s218 = scalar_select %p217, %s216, 15
      %p219 = scmp.lt.s32.totalorder %s19, 0
      %s220 = scalar_select %p219, %s19, 0
      %s221 = sadd.s32 %s220, %s218
      %s222 = smul.addr %s221, 4
      %s223 = scalar_lea.vmem %s3, %s222
      %s224 = smul.u32 8, %s18
      %v226 = vld [vmem:[%s207] sm:$0xf]
      %v227 = vld [vmem:[%s207 + $0x4] sm:$0xf]
      %v228 = vld [vmem:[%s207 + $0x8] sm:$0xf]
      %v229 = vld [vmem:[%s207 + $0xc] sm:$0xf]
      %v230 = vld [vmem:[%s207 + $0x10] sm:$0xf]
      %v231 = vld [vmem:[%s207 + $0x14] sm:$0xf]
      %v232 = vld [vmem:[%s207 + $0x18] sm:$0xf]
      %v233 = vld [vmem:[%s207 + $0x1c] sm:$0xf]
      %v234 = vld [vmem:[%s212] sm:$0xf]
      %v235 = vld [vmem:[%s212 + $0x4] sm:$0xf]
      %v236 = vld [vmem:[%s212 + $0x8] sm:$0xf]
      %v237 = vld [vmem:[%s212 + $0xc] sm:$0xf]
      %v238 = vld [vmem:[%s215] sm:$0x1]
      %v240 = vlaneseq
      %v241 = vshrl.u32 %v240, 7
      %v242 = vsub.s32 0, %v241
      %v243 = vrot.slane %v238, %v242
      %v253 = vunpack.c.l.b16 %v226
      %v254 = vunpack.c.l.b16 %v227
      %v255 = vunpack.c.l.b16 %v228
      %v256 = vunpack.c.l.b16 %v229
      %v257 = vunpack.c.l.b16 %v230
      %v258 = vunpack.c.l.b16 %v231
      %v259 = vunpack.c.l.b16 %v232
      %v260 = vunpack.c.l.b16 %v233
      %v261 = vpack.c.b16 %v254, %v253
      %v262 = vpack.c.b16 %v256, %v255
      %v263 = vpack.c.b16 %v258, %v257
      %v264 = vpack.c.b16 %v260, %v259
      %v269 = vunpack.c.l.b16 %v234
      %v270 = vunpack.c.l.b16 %v235
      %v271 = vunpack.c.l.b16 %v236
      %v272 = vunpack.c.l.b16 %v237
      %v273 = vpack.c.b16 %v270, %v269
      %v274 = vpack.c.b16 %v272, %v271
      %vm277 = vcmask 261120
      %v279 = vsel %vm277, %v261, 0
      %v282 = vsel %vm277, %v262, 0
      %v285 = vsel %vm277, %v263, 0
      %v288 = vsel %vm277, %v264, 0
      %290 = vmatprep.subr.bf16.mxu0 0
      %291 = vmatpush1.bf16.msra.mxu0 %v273
      %292 = vmatprep.subr.bf16.mxu0 0
      %293 = vmatpush1.bf16.msra.mxu0 %v274
      %294 = vmatprep.subr.bf16.mxu0 0
      %295 = vmatpush1.bf16.msra.mxu0 0
      %296 = vmatprep.subr.bf16.mxu0 0
      %297 = vmatpush1.bf16.msra.mxu0 0
      %298 = vmatprep.subr.bf16.mxu0 0
      %299 = vmatpush1.bf16.msra.mxu0 0
      %300 = vmatprep.subr.bf16.mxu0 0
      %301 = vmatpush1.bf16.msra.mxu0 0
      %302 = vmatprep.subr.bf16.mxu0 0
      %303 = vmatpush1.bf16.msra.mxu0 0
      %304 = vmatprep.subr.bf16.mxu0 0
      %305 = vmatpush1.bf16.msra.mxu0 0
      %306 = vmatprep.subr.bf16.mxu0 0
      %307 = vmatpush1.bf16.msra.mxu0 0
      %308 = vmatprep.subr.bf16.mxu0 0
      %309 = vmatpush1.bf16.msra.mxu0 0
      %310 = vmatprep.subr.bf16.mxu0 0
      %311 = vmatpush1.bf16.msra.mxu0 0
      %312 = vmatprep.subr.bf16.mxu0 0
      %313 = vmatpush1.bf16.msra.mxu0 0
      %314 = vmatprep.subr.bf16.mxu0 0
      %315 = vmatpush1.bf16.msra.mxu0 0
      %316 = vmatprep.subr.bf16.mxu0 0
      %317 = vmatpush1.bf16.msra.mxu0 0
      %318 = vmatprep.subr.bf16.mxu0 0
      %319 = vmatpush1.bf16.msra.mxu0 0
      %320 = vmatprep.subr.bf16.mxu0 0
      %321 = vmatpush1.bf16.msra.mxu0 0
      %322 = vmatprep.mubr.bf16.mxu0 0
      %323 = vmatmul.mubr.bf16.gmra.mrb[0].mxu0 %v279
      %v324 = vpop.f32.mrb[0].mxu0
      %v325 = vadd.f32 %v243, %v324
      %v326 = vpop.f32.mrb[0].mxu0
      %v327 = vpop.f32.mrb[0].mxu0
      %v328 = vadd.f32 %v243, %v327
      %v329 = vpop.f32.mrb[0].mxu0
      %330 = vmatprep.mubr.bf16.mxu0 0
      %331 = vmatmul.mubr.bf16.gmra.mrb[0].mxu0 %v282
      %v332 = vpop.f32.mrb[0].mxu0
      %v333 = vadd.f32 %v243, %v332
      %v334 = vpop.f32.mrb[0].mxu0
      %v335 = vpop.f32.mrb[0].mxu0
      %v336 = vadd.f32 %v243, %v335
      %v337 = vpop.f32.mrb[0].mxu0
      %338 = vmatprep.mubr.bf16.mxu0 0
      %339 = vmatmul.mubr.bf16.gmra.mrb[0].mxu0 %v285
      %v340 = vpop.f32.mrb[0].mxu0
      %v341 = vadd.f32 %v243, %v340
      %v342 = vpop.f32.mrb[0].mxu0
      %v343 = vpop.f32.mrb[0].mxu0
      %v344 = vadd.f32 %v243, %v343
      %v345 = vpop.f32.mrb[0].mxu0
      %346 = vmatprep.mubr.bf16.mxu0 0
      %347 = vmatmul.mubr.bf16.gmra.mrb[0].mxu0 %v288
      %v348 = vpop.f32.mrb[0].mxu0
      %v349 = vadd.f32 %v243, %v348
      %v350 = vpop.f32.mrb[0].mxu0
      %v351 = vpop.f32.mrb[0].mxu0
      %v352 = vadd.f32 %v243, %v351
      %v353 = vpop.f32.mrb[0].mxu0
      %354 = vdwg.mxu0
      %v355 = vmax.f32 %v325, 0.0
      %v356 = vmax.f32 %v328, 0.0
      %v357 = vmax.f32 %v333, 0.0
      %v358 = vmax.f32 %v336, 0.0
      %v359 = vmax.f32 %v341, 0.0
      %v360 = vmax.f32 %v344, 0.0
      %v361 = vmax.f32 %v349, 0.0
      %v362 = vmax.f32 %v352, 0.0
      %v363 = vpack.c.bf16 %v356, %v355
      %v364 = vpack.c.bf16 %v358, %v357
      %v365 = vpack.c.bf16 %v360, %v359
      %v366 = vpack.c.bf16 %v362, %v361
      %v371 = vunpack.c.l.b16 %v363
      %v372 = vunpack.c.h.b16 %v363
      %v373 = vunpack.c.l.b16 %v364
      %v374 = vunpack.c.h.b16 %v364
      %v375 = vunpack.c.l.b16 %v365
      %v376 = vunpack.c.h.b16 %v365
      %v377 = vunpack.c.l.b16 %v366
      %v378 = vunpack.c.h.b16 %v366
      %v379 = vpack.c.b16 %v371, %v371
      %v380 = vpack.c.b16 %v372, %v372
      %v381 = vpack.c.b16 %v373, %v373
      %v382 = vpack.c.b16 %v374, %v374
      %v383 = vpack.c.b16 %v375, %v375
      %v384 = vpack.c.b16 %v376, %v376
      %v385 = vpack.c.b16 %v377, %v377
      %v386 = vpack.c.b16 %v378, %v378
      %vm395 = vcmask 125952
      %396 = vst.msk [vmem:[%s223] sm:$0xf] %vm395, %v379
      %397 = vst.msk [vmem:[%s223 + $0x4] sm:$0xf] %vm395, %v380
      %398 = vst.msk [vmem:[%s223 + $0x8] sm:$0xf] %vm395, %v381
      %399 = vst.msk [vmem:[%s223 + $0xc] sm:$0xf] %vm395, %v382
      %400 = vst.msk [vmem:[%s223 + $0x10] sm:$0xf] %vm395, %v383
      %401 = vst.msk [vmem:[%s223 + $0x14] sm:$0xf] %vm395, %v384
      %402 = vst.msk [vmem:[%s223 + $0x18] sm:$0xf] %vm395, %v385
      %403 = vst.msk [vmem:[%s223 + $0x1c] sm:$0xf] %vm395, %v386
      %s404 = smul.u32 8, %s18
      %p405 = scmp.lt.s32.totalorder %s404, 15
      %s406 = scalar_select %p405, %s404, 15
      %p407 = scmp.lt.s32.totalorder %s19, 0
      %s408 = scalar_select %p407, %s19, 0
      %s409 = sadd.s32 %s408, %s406
      %s410 = smul.addr %s409, 4
      %s411 = scalar_lea.vmem %s3, %s410
      // Predicated region
      $region33: #{encoder_cnn_forward.3} parent=31 // pred_check
        %p412 = pneg %p124
      $region34: #{encoder_cnn_forward.3} parent=31 // pred_check_branch
        %414 = sbr.rel (%p412) target = $region36
      $region35: #{encoder_cnn_forward.3} parent=31 // pred_region
        %s415 = smul.u32 8, %s18
      $region36: #{encoder_cnn_forward.3} parent=31 // pred_fallthru
        _
    $region32: #{encoder_cnn_forward.3} parent=5 // pred_fallthru
      _
    %p416 = scmp.le.s32.totalorder 2, %s9
    // Predicated region
    $region37: #{encoder_cnn_forward.3} parent=5 // pred_check
      %p417 = pneg %p416
    $region38: #{encoder_cnn_forward.3} parent=5 // pred_check_branch
      %419 = sbr.rel (%p417) target = $region40
    $region39: #{encoder_cnn_forward.3} parent=5 // pred_region
      %s420 = ssub.s32 %s9, 2
      // Predicated region
      $region41: #{encoder_cnn_forward.3} parent=39 // pred_check
        %p421 = pneg %p130
      $region42: #{encoder_cnn_forward.3} parent=39 // pred_check_branch
        %423 = sbr.rel (%p421) target = $region44
      $region43: #{encoder_cnn_forward.3} parent=39 // pred_region
        %s424 = smul.u32 8, %s20
        %p425 = scmp.lt.s32.totalorder %s424, 15
        %s426 = scalar_select %p425, %s424, 15
        %p427 = scmp.lt.s32.totalorder %s21, 0
        %s428 = scalar_select %p427, %s21, 0
        %s429 = sadd.s32 %s428, %s426
        %s430 = smul.addr %s429, 4
        %s431 = scalar_lea.vmem %s3, %s430
      $region44: #{encoder_cnn_forward.3} parent=39 // pred_fallthru
        _
    $region40: #{encoder_cnn_forward.3} parent=5 // pred_fallthru
      _
  $region6: #{encoder_cnn_forward.3} parent=0 // loop_footer
    %s13 = sadd.s32 1, %s9
  $region7: #{encoder_cnn_forward.3} parent=0 // loop_footer_branch
    %8 = sbr.rel target = $region3
  $region8: #{encoder_cnn_forward.3} parent=0 // loop_exit
    _

// kernel: encoder_cnn_forward.4
$region0: #{encoder_cnn_forward.4}
  #allocation0 [shape = 'u32[]', space=smem, size = 0x4, offset = 0x4, fixed_abs, tag = 'smem constant byte address 0x4 - core index']
  #allocation1 [shape = 'u32[144,128]{1,0:T(1,128)}', space=vmem, size = 0x12000, scoped, tag = 'internal scratch']
  %s0 = inlined_call_operand.vmem [shape: bf16[128,144], index: 0, kind: input, shape index: {}]
  %s1 = inlined_call_operand.vmem [shape: bf16[144,32], index: 1, kind: input, shape index: {}]
  %s2 = inlined_call_operand.vmem [shape: f32[1,32], index: 2, kind: input, shape index: {}]
  %s3 = inlined_call_operand.vmem [shape: bf16[128,32], index: 3, kind: output, shape index: {}]
  %s4 = sld [smem:[#allocation0]]
  $region45: #{encoder_cnn_forward.4} parent=0
    _
  %s6 = ssub.s32 1, %s4
  %s7 = scalar_select 0, %s6, %s4
  loop: start=0, step=1, limit=4
  $region2: #{encoder_cnn_forward.4} parent=0 // loop_pre_header
    _
  $region3: #{encoder_cnn_forward.4} parent=0 // loop_header
    %s9 = sphi 0, %s13
    %p10 = scmp.ge.s32.totalorder %s9, 4
    %s16 = sphi 0, %s28
    %s17 = sphi 0, %s24
    %s18 = sphi 0, %s16
    %s19 = sphi 0, %s17
    %s20 = sphi 0, %s18
    %s21 = sphi 0, %s19
    %s31 = sphi 0, %s33
    %s34 = sphi 0, %s31
    %s35 = sphi 0, %s34
    %s51 = sphi 0, %s35
    %s57 = sphi 0, %s59
    %s60 = sphi 0, %s57
    %s61 = sphi 0, %s60
    %s77 = sphi 0, %s61
    %s83 = sphi 0, %s85
    %s86 = sphi 0, %s83
    %s87 = sphi 0, %s86
    %s103 = sphi 0, %s87
    %s111 = sphi 0, %s113
    %s114 = sphi 0, %s111
    %s115 = sphi 0, %s114
    %s131 = sphi 0, %s115
  $region4: #{encoder_cnn_forward.4} parent=0 // loop_header_branch
    %12 = sbr.rel (%p10) target = $region8
  $region5: #{encoder_cnn_forward.4} parent=0 // loop_body
    %s14 = ssub.s32 %s9, 1
    %s15 = ssub.s32 %s9, 2
    %s22 = sadd.s32 1, %s17
    %p23 = scmp.ge.s32.totalorder %s22, 1
    %s24 = scalar_select %p23, 0, %s22
    %s25 = sadd.s32 1, %s16
    %s26 = scalar_select %p23, %s25, %s16
    %p27 = scmp.ge.s32.totalorder %s26, 2
    %s28 = scalar_select %p27, 0, %s26
    %s29 = ssub.s32 %s16, %s28
    %p30 = scmp.eq.s32.totalorder %s29, 0
    %s32 = sadd.s32 %s31, 1
    %s33 = scalar_select %p30, %s31, %s32
    %p36 = pneg %p30
    %p37 = scmp.eq.s32.totalorder %s9, 1
    %p38 = por %p36, %p37
    %p39 = scmp.ne.s32.totalorder %s31, %s34
    %p40 = scmp.eq.s32.totalorder %s9, 0
    %p41 = por %p39, %p40
    %p42 = scmp.ne.s32.totalorder %s31, %s34
    %p43 = scmp.eq.s32.totalorder %s14, 1
    %p44 = por %p42, %p43
    %p45 = scmp.ne.s32.totalorder %s34, %s35
    %p46 = scmp.eq.s32.totalorder %s14, 0
    %p47 = por %p45, %p46
    %p48 = scmp.ne.s32.totalorder %s34, %s35
    %p49 = scmp.eq.s32.totalorder %s15, 1
    %p50 = por %p48, %p49
    %p52 = scmp.ne.s32.totalorder %s35, %s51
    %p53 = scmp.eq.s32.totalorder %s15, 0
    %p54 = por %p52, %p53
    %s55 = ssub.s32 %s17, %s24
    %p56 = scmp.eq.s32.totalorder %s55, 0
    %s58 = sadd.s32 %s57, 1
    %s59 = scalar_select %p56, %s57, %s58
    %p62 = pneg %p56
    %p63 = scmp.eq.s32.totalorder %s9, 1
    %p64 = por %p62, %p63
    %p65 = scmp.ne.s32.totalorder %s57, %s60
    %p66 = scmp.eq.s32.totalorder %s9, 0
    %p67 = por %p65, %p66
    %p68 = scmp.ne.s32.totalorder %s57, %s60
    %p69 = scmp.eq.s32.totalorder %s14, 1
    %p70 = por %p68, %p69
    %p71 = scmp.ne.s32.totalorder %s60, %s61
    %p72 = scmp.eq.s32.totalorder %s14, 0
    %p73 = por %p71, %p72
    %p74 = scmp.ne.s32.totalorder %s60, %s61
    %p75 = scmp.eq.s32.totalorder %s15, 1
    %p76 = por %p74, %p75
    %p78 = scmp.ne.s32.totalorder %s61, %s77
    %p79 = scmp.eq.s32.totalorder %s15, 0
    %p80 = por %p78, %p79
    %s81 = ssub.s32 %s17, %s24
    %p82 = scmp.eq.s32.totalorder %s81, 0
    %s84 = sadd.s32 %s83, 1
    %s85 = scalar_select %p82, %s83, %s84
    %p88 = pneg %p82
    %p89 = scmp.eq.s32.totalorder %s9, 1
    %p90 = por %p88, %p89
    %p91 = scmp.ne.s32.totalorder %s83, %s86
    %p92 = scmp.eq.s32.totalorder %s9, 0
    %p93 = por %p91, %p92
    %p94 = scmp.ne.s32.totalorder %s83, %s86
    %p95 = scmp.eq.s32.totalorder %s14, 1
    %p96 = por %p94, %p95
    %p97 = scmp.ne.s32.totalorder %s86, %s87
    %p98 = scmp.eq.s32.totalorder %s14, 0
    %p99 = por %p97, %p98
    %p100 = scmp.ne.s32.totalorder %s86, %s87
    %p101 = scmp.eq.s32.totalorder %s15, 1
    %p102 = por %p100, %p101
    %p104 = scmp.ne.s32.totalorder %s87, %s103
    %p105 = scmp.eq.s32.totalorder %s15, 0
    %p106 = por %p104, %p105
    %s107 = ssub.s32 %s16, %s28
    %s108 = ssub.s32 %s17, %s24
    %s109 = sor.u32 %s107, %s108
    %p110 = scmp.eq.s32.totalorder %s109, 0
    %s112 = sadd.s32 %s111, 1
    %s113 = scalar_select %p110, %s111, %s112
    %p116 = pneg %p110
    %p117 = scmp.eq.s32.totalorder %s9, 1
    %p118 = por %p116, %p117
    %p119 = scmp.ne.s32.totalorder %s111, %s114
    %p120 = scmp.eq.s32.totalorder %s9, 0
    %p121 = por %p119, %p120
    %p122 = scmp.ne.s32.totalorder %s111, %s114
    %p123 = scmp.eq.s32.totalorder %s14, 1
    %p124 = por %p122, %p123
    %p125 = scmp.ne.s32.totalorder %s114, %s115
    %p126 = scmp.eq.s32.totalorder %s14, 0
    %p127 = por %p125, %p126
    %p128 = scmp.ne.s32.totalorder %s114, %s115
    %p129 = scmp.eq.s32.totalorder %s15, 1
    %p130 = por %p128, %p129
    %p132 = scmp.ne.s32.totalorder %s115, %s131
    %p133 = scmp.eq.s32.totalorder %s15, 0
    %p134 = por %p132, %p133
    %p135 = scmp.le.s32.totalorder 1, %s9
    %p136 = scmp.lt.s32.totalorder %s9, 3
    %p137 = pnand %p135, %p136
    %p138 = pneg %p137
    // Predicated region
    $region9: #{encoder_cnn_forward.4} parent=5 // pred_check
      _
    $region10: #{encoder_cnn_forward.4} parent=5 // pred_check_branch
      %140 = sbr.rel (%p137) target = $region12
    $region11: #{encoder_cnn_forward.4} parent=5 // pred_region
      %s141 = ssub.s32 %s9, 1
      // Predicated region
      $region13: #{encoder_cnn_forward.4} parent=11 // pred_check
        %p142 = pneg %p73
      $region14: #{encoder_cnn_forward.4} parent=11 // pred_check_branch
        %144 = sbr.rel (%p142) target = $region16
      $region15: #{encoder_cnn_forward.4} parent=11 // pred_region
        %p145 = scmp.lt.s32.totalorder %s19, 0
        %s146 = scalar_select %p145, %s19, 0
        %s147 = smul.addr %s146, 4
        %s148 = scalar_lea.vmem %s1, %s147
      $region16: #{encoder_cnn_forward.4} parent=11 // pred_fallthru
        _
      // Predicated region
      $region17: #{encoder_cnn_forward.4} parent=11 // pred_check
        %p149 = pneg %p99
      $region18: #{encoder_cnn_forward.4} parent=11 // pred_check_branch
        %151 = sbr.rel (%p149) target = $region20
      $region19: #{encoder_cnn_forward.4} parent=11 // pred_region
        %p152 = scmp.lt.s32.totalorder %s19, 0
        %s153 = scalar_select %p152, %s19, 0
        %s154 = scalar_lea.vmem %s2, %s153
      $region20: #{encoder_cnn_forward.4} parent=11 // pred_fallthru
        _
    $region12: #{encoder_cnn_forward.4} parent=5 // pred_fallthru
      _
    %p155 = scmp.lt.s32.totalorder %s9, 2
    // Predicated region
    $region21: #{encoder_cnn_forward.4} parent=5 // pred_check
      %p156 = pneg %p155
    $region22: #{encoder_cnn_forward.4} parent=5 // pred_check_branch
      %158 = sbr.rel (%p156) target = $region24
    $region23: #{encoder_cnn_forward.4} parent=5 // pred_region
      // Predicated region
      $region25: #{encoder_cnn_forward.4} parent=23 // pred_check
        %p159 = pneg %p41
      $region26: #{encoder_cnn_forward.4} parent=23 // pred_check_branch
        %161 = sbr.rel (%p159) target = $region28
      $region27: #{encoder_cnn_forward.4} parent=23 // pred_region
        %s162 = smul.u32 8, %s16
        %p163 = scmp.lt.s32.totalorder %s162, 15
        %s164 = scalar_select %p163, %s162, 15
        %s165 = smul.addr %s164, 2
        %s166 = smul.addr %s165, 4
        %s167 = scalar_lea.vmem %s0, %s166
        %s168 = smul.u32 8, %s16
      $region28: #{encoder_cnn_forward.4} parent=23 // pred_fallthru
        _
    $region24: #{encoder_cnn_forward.4} parent=5 // pred_fallthru
      _
    %p169 = scmp.le.s32.totalorder 1, %s9
    %p170 = scmp.lt.s32.totalorder %s9, 3
    %p171 = pnand %p169, %p170
    %p172 = pneg %p171
    // Predicated region
    $region29: #{encoder_cnn_forward.4} parent=5 // pred_check
      _
    $region30: #{encoder_cnn_forward.4} parent=5 // pred_check_branch
      %174 = sbr.rel (%p171) target = $region32
    $region31: #{encoder_cnn_forward.4} parent=5 // pred_region
      %s175 = ssub.s32 %s9, 1
      %s176 = smul.u32 8, %s18
      %p177 = scmp.lt.s32.totalorder %s176, 15
      %s178 = scalar_select %p177, %s176, 15
      %s179 = smul.addr %s178, 2
      %s180 = smul.addr %s179, 4
      %s181 = scalar_lea.vmem %s0, %s180
      %p182 = pneg %p47
      %p183 = pneg %p44
      %p184 = scmp.lt.s32.totalorder %s19, 0
      %s185 = scalar_select %p184, %s19, 0
      %s186 = smul.addr %s185, 4
      %s187 = scalar_lea.vmem %s1, %s186
      %p188 = pneg %p73
      %p189 = pneg %p70
      %p190 = scmp.lt.s32.totalorder %s19, 0
      %s191 = scalar_select %p190, %s19, 0
      %s192 = scalar_lea.vmem %s2, %s191
      %p193 = pneg %p99
      %p194 = pneg %p96
      %p195 = pneg %p127
      %p196 = pneg %p124
      %s197 = smul.u32 8, %s18
      %p198 = scmp.lt.s32.totalorder %s197, 15
      %s199 = scalar_select %p198, %s197, 15
      %p200 = scmp.lt.s32.totalorder %s19, 0
      %s201 = scalar_select %p200, %s19, 0
      %s202 = sadd.s32 %s201, %s199
      %s203 = smul.addr %s202, 4
      %s204 = scalar_lea.vmem %s3, %s203
      %s205 = smul.u32 8, %s18
      %p206 = scmp.lt.s32.totalorder %s205, 15
      %s207 = scalar_select %p206, %s205, 15
      %s208 = smul.addr %s207, 2
      %s209 = smul.addr %s208, 4
      %s210 = scalar_lea.vmem %s0, %s209
      %s211 = smul.u32 8, %s18
      %p212 = scmp.lt.s32.totalorder %s19, 0
      %s213 = scalar_select %p212, %s19, 0
      %s214 = smul.addr %s213, 4
      %s215 = scalar_lea.vmem %s1, %s214
      %p216 = scmp.lt.s32.totalorder %s19, 0
      %s217 = scalar_select %p216, %s19, 0
      %s218 = scalar_lea.vmem %s2, %s217
      %s219 = smul.u32 8, %s18
      %p220 = scmp.lt.s32.totalorder %s219, 15
      %s221 = scalar_select %p220, %s219, 15
      %p222 = scmp.lt.s32.totalorder %s19, 0
      %s223 = scalar_select %p222, %s19, 0
      %s224 = sadd.s32 %s223, %s221
      %s225 = smul.addr %s224, 4
      %s226 = scalar_lea.vmem %s3, %s225
      %s227 = smul.u32 8, %s18
      %v229 = vld [vmem:[%s210] sm:$0xff]
      %v230 = vld [vmem:[%s210 + $0x8] sm:$0xff]
      %v231 = vld [vmem:[%s210 + $0x10] sm:$0xff]
      %v232 = vld [vmem:[%s210 + $0x18] sm:$0xff]
      %v233 = vld [vmem:[%s210 + $0x20] sm:$0xff]
      %v234 = vld [vmem:[%s210 + $0x28] sm:$0xff]
      %v235 = vld [vmem:[%s210 + $0x30] sm:$0xff]
      %v236 = vld [vmem:[%s210 + $0x38] sm:$0xff]
      %v237 = vld [vmem:[%s215] sm:$0xf]
      %v238 = vld [vmem:[%s215 + $0x4] sm:$0xf]
      %v239 = vld [vmem:[%s215 + $0x8] sm:$0xf]
      %v240 = vld [vmem:[%s215 + $0xc] sm:$0xf]
      %v241 = vld [vmem:[%s215 + $0x10] sm:$0xf]
      %v242 = vld [vmem:[%s215 + $0x14] sm:$0xf]
      %v243 = vld [vmem:[%s215 + $0x18] sm:$0xf]
      %v244 = vld [vmem:[%s215 + $0x1c] sm:$0xf]
      %v245 = vld [vmem:[%s215 + $0x20] sm:$0xf]
      %v246 = vld [vmem:[%s215 + $0x24] sm:$0xf]
      %v247 = vld [vmem:[%s215 + $0x28] sm:$0xf]
      %v248 = vld [vmem:[%s215 + $0x2c] sm:$0xf]
      %v249 = vld [vmem:[%s215 + $0x30] sm:$0xf]
      %v250 = vld [vmem:[%s215 + $0x34] sm:$0xf]
      %v251 = vld [vmem:[%s215 + $0x38] sm:$0xf]
      %v252 = vld [vmem:[%s215 + $0x3c] sm:$0xf]
      %v253 = vld [vmem:[%s215 + $0x40] sm:$0xf]
      %v254 = vld [vmem:[%s215 + $0x44] sm:$0xf]
      %v255 = vld [vmem:[%s218] sm:$0x1]
      %v257 = vlaneseq
      %v258 = vshrl.u32 %v257, 7
      %v259 = vsub.s32 0, %v258
      %v260 = vrot.slane %v255, %v259
      %v270 = vunpack.c.l.b16 %v229
      %v271 = vunpack.c.h.b16 %v229
      %v272 = vunpack.c.l.b16 %v230
      %v273 = vunpack.c.h.b16 %v230
      %v274 = vunpack.c.l.b16 %v231
      %v275 = vunpack.c.h.b16 %v231
      %v276 = vunpack.c.l.b16 %v232
      %v277 = vunpack.c.h.b16 %v232
      %v278 = vunpack.c.l.b16 %v233
      %v279 = vunpack.c.h.b16 %v233
      %v280 = vunpack.c.l.b16 %v234
      %v281 = vunpack.c.h.b16 %v234
      %v282 = vunpack.c.l.b16 %v235
      %v283 = vunpack.c.h.b16 %v235
      %v284 = vunpack.c.l.b16 %v236
      %v285 = vunpack.c.h.b16 %v236
      %v286 = vpack.c.b16 %v272, %v270
      %v287 = vpack.c.b16 %v273, %v271
      %v288 = vpack.c.b16 %v276, %v274
      %v289 = vpack.c.b16 %v277, %v275
      %v290 = vpack.c.b16 %v280, %v278
      %v291 = vpack.c.b16 %v281, %v279
      %v292 = vpack.c.b16 %v284, %v282
      %v293 = vpack.c.b16 %v285, %v283
      %v316 = vunpack.c.l.b16 %v237
      %v317 = vunpack.c.l.b16 %v238
      %v318 = vunpack.c.l.b16 %v239
      %v319 = vunpack.c.l.b16 %v240
      %v320 = vunpack.c.l.b16 %v241
      %v321 = vunpack.c.l.b16 %v242
      %v322 = vunpack.c.l.b16 %v243
      %v323 = vunpack.c.l.b16 %v244
      %v324 = vunpack.c.l.b16 %v245
      %v325 = vunpack.c.l.b16 %v246
      %v326 = vunpack.c.l.b16 %v247
      %v327 = vunpack.c.l.b16 %v248
      %v328 = vunpack.c.l.b16 %v249
      %v329 = vunpack.c.l.b16 %v250
      %v330 = vunpack.c.l.b16 %v251
      %v331 = vunpack.c.l.b16 %v252
      %v332 = vunpack.c.l.b16 %v253
      %v333 = vunpack.c.l.b16 %v254
      %v334 = vpack.c.b16 %v317, %v316
      %v335 = vpack.c.b16 %v319, %v318
      %v336 = vpack.c.b16 %v321, %v320
      %v337 = vpack.c.b16 %v323, %v322
      %v338 = vpack.c.b16 %v325, %v324
      %v339 = vpack.c.b16 %v327, %v326
      %v340 = vpack.c.b16 %v329, %v328
      %v341 = vpack.c.b16 %v331, %v330
      %v342 = vpack.c.b16 %v333, %v332
      %vm352 = vcmask 130048
      %v354 = vsel %vm352, %v287, 0
      %v357 = vsel %vm352, %v289, 0
      %v360 = vsel %vm352, %v291, 0
      %v363 = vsel %vm352, %v293, 0
      %365 = vmatprep.subr.bf16.mxu0 0
      %366 = vmatpush1.bf16.msra.mxu0 %v334
      %367 = vmatprep.subr.bf16.mxu0 0
      %368 = vmatpush1.bf16.msra.mxu0 %v335
      %369 = vmatprep.subr.bf16.mxu0 0
      %370 = vmatpush1.bf16.msra.mxu0 %v336
      %371 = vmatprep.subr.bf16.mxu0 0
      %372 = vmatpush1.bf16.msra.mxu0 %v337
      %373 = vmatprep.subr.bf16.mxu0 0
      %374 = vmatpush1.bf16.msra.mxu0 %v338
      %375 = vmatprep.subr.bf16.mxu0 0
      %376 = vmatpush1.bf16.msra.mxu0 %v339
      %377 = vmatprep.subr.bf16.mxu0 0
      %378 = vmatpush1.bf16.msra.mxu0 %v340
      %379 = vmatprep.subr.bf16.mxu0 0
      %380 = vmatpush1.bf16.msra.mxu0 %v341
      %381 = vmatprep.subr.bf16.mxu0 0
      %382 = vmatpush1.bf16.msra.mxu0 %v342
      %383 = vmatprep.subr.bf16.mxu0 0
      %384 = vmatpush1.bf16.msra.mxu0 0
      %385 = vmatprep.subr.bf16.mxu0 0
      %386 = vmatpush1.bf16.msra.mxu0 0
      %387 = vmatprep.subr.bf16.mxu0 0
      %388 = vmatpush1.bf16.msra.mxu0 0
      %389 = vmatprep.subr.bf16.mxu0 0
      %390 = vmatpush1.bf16.msra.mxu0 0
      %391 = vmatprep.subr.bf16.mxu0 0
      %392 = vmatpush1.bf16.msra.mxu0 0
      %393 = vmatprep.subr.bf16.mxu0 0
      %394 = vmatpush1.bf16.msra.mxu0 0
      %395 = vmatprep.subr.bf16.mxu0 0
      %396 = vmatpush1.bf16.msra.mxu0 0
      %397 = vmatprep.mubr.bf16.mxu0 %v354
      %398 = vmatmul.mubr.bf16.gmra.mrb[0].mxu0 %v286
      %v399 = vpop.f32.mrb[0].mxu0
      %v400 = vadd.f32 %v260, %v399
      %v401 = vpop.f32.mrb[0].mxu0
      %v402 = vpop.f32.mrb[0].mxu0
      %v403 = vadd.f32 %v260, %v402
      %v404 = vpop.f32.mrb[0].mxu0
      %405 = vmatprep.mubr.bf16.mxu0 %v357
      %406 = vmatmul.mubr.bf16.gmra.mrb[0].mxu0 %v288
      %v407 = vpop.f32.mrb[0].mxu0
      %v408 = vadd.f32 %v260, %v407
      %v409 = vpop.f32.mrb[0].mxu0
      %v410 = vpop.f32.mrb[0].mxu0
      %v411 = vadd.f32 %v260, %v410
      %v412 = vpop.f32.mrb[0].mxu0
      %413 = vmatprep.mubr.bf16.mxu0 %v360
      %414 = vmatmul.mubr.bf16.gmra.mrb[0].mxu0 %v290
      %v415 = vpop.f32.mrb[0].mxu0
      %v416 = vadd.f32 %v260, %v415
      %v417 = vpop.f32.mrb[0].mxu0
      %v418 = vpop.f32.mrb[0].mxu0
      %v419 = vadd.f32 %v260, %v418
      %v420 = vpop.f32.mrb[0].mxu0
      %421 = vmatprep.mubr.bf16.mxu0 %v363
      %422 = vmatmul.mubr.bf16.gmra.mrb[0].mxu0 %v292
      %v423 = vpop.f32.mrb[0].mxu0
      %v424 = vadd.f32 %v260, %v423
      %v425 = vpop.f32.mrb[0].mxu0
      %v426 = vpop.f32.mrb[0].mxu0
      %v427 = vadd.f32 %v260, %v426
      %v428 = vpop.f32.mrb[0].mxu0
      %429 = vdwg.mxu0
      %v430 = vmax.f32 %v400, 0.0
      %v431 = vmax.f32 %v403, 0.0
      %v432 = vmax.f32 %v408, 0.0
      %v433 = vmax.f32 %v411, 0.0
      %v434 = vmax.f32 %v416, 0.0
      %v435 = vmax.f32 %v419, 0.0
      %v436 = vmax.f32 %v424, 0.0
      %v437 = vmax.f32 %v427, 0.0
      %v438 = vpack.c.bf16 %v431, %v430
      %v439 = vpack.c.bf16 %v433, %v432
      %v440 = vpack.c.bf16 %v435, %v434
      %v441 = vpack.c.bf16 %v437, %v436
      %v446 = vunpack.c.l.b16 %v438
      %v447 = vunpack.c.h.b16 %v438
      %v448 = vunpack.c.l.b16 %v439
      %v449 = vunpack.c.h.b16 %v439
      %v450 = vunpack.c.l.b16 %v440
      %v451 = vunpack.c.h.b16 %v440
      %v452 = vunpack.c.l.b16 %v441
      %v453 = vunpack.c.h.b16 %v441
      %v454 = vpack.c.b16 %v446, %v446
      %v455 = vpack.c.b16 %v447, %v447
      %v456 = vpack.c.b16 %v448, %v448
      %v457 = vpack.c.b16 %v449, %v449
      %v458 = vpack.c.b16 %v450, %v450
      %v459 = vpack.c.b16 %v451, %v451
      %v460 = vpack.c.b16 %v452, %v452
      %v461 = vpack.c.b16 %v453, %v453
      %vm470 = vcmask 257024
      %471 = vst.msk [vmem:[%s226] sm:$0xf] %vm470, %v454
      %472 = vst.msk [vmem:[%s226 + $0x4] sm:$0xf] %vm470, %v455
      %473 = vst.msk [vmem:[%s226 + $0x8] sm:$0xf] %vm470, %v456
      %474 = vst.msk [vmem:[%s226 + $0xc] sm:$0xf] %vm470, %v457
      %475 = vst.msk [vmem:[%s226 + $0x10] sm:$0xf] %vm470, %v458
      %476 = vst.msk [vmem:[%s226 + $0x14] sm:$0xf] %vm470, %v459
      %477 = vst.msk [vmem:[%s226 + $0x18] sm:$0xf] %vm470, %v460
      %478 = vst.msk [vmem:[%s226 + $0x1c] sm:$0xf] %vm470, %v461
      %s479 = smul.u32 8, %s18
      %p480 = scmp.lt.s32.totalorder %s479, 15
      %s481 = scalar_select %p480, %s479, 15
      %p482 = scmp.lt.s32.totalorder %s19, 0
      %s483 = scalar_select %p482, %s19, 0
      %s484 = sadd.s32 %s483, %s481
      %s485 = smul.addr %s484, 4
      %s486 = scalar_lea.vmem %s3, %s485
      // Predicated region
      $region33: #{encoder_cnn_forward.4} parent=31 // pred_check
        %p487 = pneg %p124
      $region34: #{encoder_cnn_forward.4} parent=31 // pred_check_branch
        %489 = sbr.rel (%p487) target = $region36
      $region35: #{encoder_cnn_forward.4} parent=31 // pred_region
        %s490 = smul.u32 8, %s18
      $region36: #{encoder_cnn_forward.4} parent=31 // pred_fallthru
        _
    $region32: #{encoder_cnn_forward.4} parent=5 // pred_fallthru
      _
    %p491 = scmp.le.s32.totalorder 2, %s9
    // Predicated region
    $region37: #{encoder_cnn_forward.4} parent=5 // pred_check
      %p492 = pneg %p491
    $region38: #{encoder_cnn_forward.4} parent=5 // pred_check_branch
      %494 = sbr.rel (%p492) target = $region40
    $region39: #{encoder_cnn_forward.4} parent=5 // pred_region
      %s495 = ssub.s32 %s9, 2
      // Predicated region
      $region41: #{encoder_cnn_forward.4} parent=39 // pred_check
        %p496 = pneg %p130
      $region42: #{encoder_cnn_forward.4} parent=39 // pred_check_branch
        %498 = sbr.rel (%p496) target = $region44
      $region43: #{encoder_cnn_forward.4} parent=39 // pred_region
        %s499 = smul.u32 8, %s20
        %p500 = scmp.lt.s32.totalorder %s499, 15
        %s501 = scalar_select %p500, %s499, 15
        %p502 = scmp.lt.s32.totalorder %s21, 0
        %s503 = scalar_select %p502, %s21, 0
        %s504 = sadd.s32 %s503, %s501
        %s505 = smul.addr %s504, 4
        %s506 = scalar_lea.vmem %s3, %s505
      $region44: #{encoder_cnn_forward.4} parent=39 // pred_fallthru
        _
    $region40: #{encoder_cnn_forward.4} parent=5 // pred_fallthru
      _
  $region6: #{encoder_cnn_forward.4} parent=0 // loop_footer
    %s13 = sadd.s32 1, %s9
  $region7: #{encoder_cnn_forward.4} parent=0 // loop_footer_branch
    %8 = sbr.rel target = $region3
  $region8: #{encoder_cnn_forward.4} parent=0 // loop_exit
    _

// kernel: encoder_cnn_forward.5
$region0: #{encoder_cnn_forward.5}
  #allocation0 [shape = 'u32[]', space=smem, size = 0x4, offset = 0x4, fixed_abs, tag = 'smem constant byte address 0x4 - core index']
  #allocation1 [shape = 'u32[144,128]{1,0:T(1,128)}', space=vmem, size = 0x12000, scoped, tag = 'internal scratch']
  %s0 = inlined_call_operand.vmem [shape: f32[16,64], index: 0, kind: input, shape index: {}]
  %s1 = inlined_call_operand.vmem [shape: bf16[2,64,32], index: 1, kind: input, shape index: {}]
  %s2 = inlined_call_operand.hbm [shape: f32[2,16,32], index: 2, kind: output, shape index: {}]
  %s3 = sld [smem:[#allocation0]]
  $region41: #{encoder_cnn_forward.5} parent=0
    _
  %s5 = ssub.s32 1, %s3
  %s6 = scalar_select 0, %s5, %s3
  $region1: #{encoder_cnn_forward.5} parent=0
    #allocation2 [shape = 'u8[16384]{0}', space=vmem, size = 0x4000, scoped, tag = 'output window, operand 0']
    #allocation3 [shape = 's32[2]{0}', space=sflag, size = 0x8, scoped, tag = 'scoped memory for encoder_cnn_forward.5']
    %7 = vsyncpa [#allocation3], 0
    %s8 = scalar_lea.sflag [#allocation3], 1
    %9 = vsyncpa %s8, 0
    loop: start=0, step=1, limit=4
    $region2: #{encoder_cnn_forward.5} parent=1 // loop_pre_header
      _
    $region3: #{encoder_cnn_forward.5} parent=1 // loop_header
      %s11 = sphi 0, %s15
      %p12 = scmp.ge.s32.totalorder %s11, 4
      %s19 = sphi 0, %s19
      %s21 = sphi 0, %s19
      %s22 = sphi 0, %s21
      %s36 = sphi 0, %s22
      %s42 = sphi 0, %s44
      %s45 = sphi 0, %s42
      %s46 = sphi 0, %s45
      %s62 = sphi 0, %s46
      %s68 = sphi 0, %s70
      %s71 = sphi 0, %s68
      %s72 = sphi 0, %s71
      %s88 = sphi 0, %s72
    $region4: #{encoder_cnn_forward.5} parent=1 // loop_header_branch
      %14 = sbr.rel (%p12) target = $region8
    $region5: #{encoder_cnn_forward.5} parent=1 // loop_body
      %s16 = ssub.s32 %s11, 1
      %s17 = ssub.s32 %s11, 2
      %s18 = sadd.s32 %s11, 1
      %s20 = sadd.s32 %s19, 1
      %p23 = scmp.eq.s32.totalorder %s11, 1
      %p24 = scmp.ne.s32.totalorder %s19, %s21
      %p25 = scmp.eq.s32.totalorder %s11, 0
      %p26 = por %p24, %p25
      %p27 = scmp.ne.s32.totalorder %s19, %s21
      %p28 = scmp.eq.s32.totalorder %s16, 1
      %p29 = por %p27, %p28
      %p30 = scmp.ne.s32.totalorder %s21, %s22
      %p31 = scmp.eq.s32.totalorder %s16, 0
      %p32 = por %p30, %p31
      %p33 = scmp.ne.s32.totalorder %s21, %s22
      %p34 = scmp.eq.s32.totalorder %s17, 1
      %p35 = por %p33, %p34
      %p37 = scmp.ne.s32.totalorder %s22, %s36
      %p38 = scmp.eq.s32.totalorder %s17, 0
      %p39 = por %p37, %p38
      %s40 = ssub.s32 %s11, %s18
      %p41 = scmp.eq.s32.totalorder %s40, 0
      %s43 = sadd.s32 %s42, 1
      %s44 = scalar_select %p41, %s42, %s43
      %p47 = pneg %p41
      %p48 = scmp.eq.s32.totalorder %s11, 1
      %p49 = por %p47, %p48
      %p50 = scmp.ne.s32.totalorder %s42, %s45
      %p51 = scmp.eq.s32.totalorder %s11, 0
      %p52 = por %p50, %p51
      %p53 = scmp.ne.s32.totalorder %s42, %s45
      %p54 = scmp.eq.s32.totalorder %s16, 1
      %p55 = por %p53, %p54
      %p56 = scmp.ne.s32.totalorder %s45, %s46
      %p57 = scmp.eq.s32.totalorder %s16, 0
      %p58 = por %p56, %p57
      %p59 = scmp.ne.s32.totalorder %s45, %s46
      %p60 = scmp.eq.s32.totalorder %s17, 1
      %p61 = por %p59, %p60
      %p63 = scmp.ne.s32.totalorder %s46, %s62
      %p64 = scmp.eq.s32.totalorder %s17, 0
      %p65 = por %p63, %p64
      %s66 = ssub.s32 %s11, %s18
      %p67 = scmp.eq.s32.totalorder %s66, 0
      %s69 = sadd.s32 %s68, 1
      %s70 = scalar_select %p67, %s68, %s69
      %p73 = pneg %p67
      %p74 = scmp.eq.s32.totalorder %s11, 1
      %p75 = por %p73, %p74
      %p76 = scmp.ne.s32.totalorder %s68, %s71
      %p77 = scmp.eq.s32.totalorder %s11, 0
      %p78 = por %p76, %p77
      %p79 = scmp.ne.s32.totalorder %s68, %s71
      %p80 = scmp.eq.s32.totalorder %s16, 1
      %p81 = por %p79, %p80
      %p82 = scmp.ne.s32.totalorder %s71, %s72
      %p83 = scmp.eq.s32.totalorder %s16, 0
      %p84 = por %p82, %p83
      %p85 = scmp.ne.s32.totalorder %s71, %s72
      %p86 = scmp.eq.s32.totalorder %s17, 1
      %p87 = por %p85, %p86
      %p89 = scmp.ne.s32.totalorder %s72, %s88
      %p90 = scmp.eq.s32.totalorder %s17, 0
      %p91 = por %p89, %p90
      %p92 = scmp.le.s32.totalorder 1, %s11
      %p93 = scmp.lt.s32.totalorder %s11, 3
      %p94 = pnand %p92, %p93
      %p95 = pneg %p94
      // Predicated region
      $region9: #{encoder_cnn_forward.5} parent=5 // pred_check
        _
      $region10: #{encoder_cnn_forward.5} parent=5 // pred_check_branch
        %97 = sbr.rel (%p94) target = $region12
      $region11: #{encoder_cnn_forward.5} parent=5 // pred_region
        %s98 = ssub.s32 %s11, 1
        // Predicated region
        $region13: #{encoder_cnn_forward.5} parent=11 // pred_check
          %p99 = pneg %p32
        $region14: #{encoder_cnn_forward.5} parent=11 // pred_check_branch
          %101 = sbr.rel (%p99) target = $region16
        $region15: #{encoder_cnn_forward.5} parent=11 // pred_region
          _
        $region16: #{encoder_cnn_forward.5} parent=11 // pred_fallthru
          _
      $region12: #{encoder_cnn_forward.5} parent=5 // pred_fallthru
        _
      %p102 = scmp.lt.s32.totalorder %s11, 2
      // Predicated region
      $region17: #{encoder_cnn_forward.5} parent=5 // pred_check
        %p103 = pneg %p102
      $region18: #{encoder_cnn_forward.5} parent=5 // pred_check_branch
        %105 = sbr.rel (%p103) target = $region20
      $region19: #{encoder_cnn_forward.5} parent=5 // pred_region
        // Predicated region
        $region21: #{encoder_cnn_forward.5} parent=19 // pred_check
          %p106 = pneg %p52
        $region22: #{encoder_cnn_forward.5} parent=19 // pred_check_branch
          %108 = sbr.rel (%p106) target = $region24
        $region23: #{encoder_cnn_forward.5} parent=19 // pred_region
          %p109 = scmp.lt.s32.totalorder %s11, 1
          %s110 = scalar_select %p109, %s11, 1
          %s111 = smul.addr %s110, 8
          %s112 = smul.addr %s111, 4
          %s113 = scalar_lea.vmem %s1, %s112
        $region24: #{encoder_cnn_forward.5} parent=19 // pred_fallthru
          _
      $region20: #{encoder_cnn_forward.5} parent=5 // pred_fallthru
        _
      %p114 = scmp.le.s32.totalorder 1, %s11
      %p115 = scmp.lt.s32.totalorder %s11, 3
      %p116 = pnand %p114, %p115
      %p117 = pneg %p116
      // Predicated region
      $region25: #{encoder_cnn_forward.5} parent=5 // pred_check
        _
      $region26: #{encoder_cnn_forward.5} parent=5 // pred_check_branch
        %119 = sbr.rel (%p116) target = $region28
      $region27: #{encoder_cnn_forward.5} parent=5 // pred_region
        %s120 = ssub.s32 %s11, 1
        %p121 = pneg %p32
        %p122 = pneg %p29
        %p123 = scmp.lt.s32.totalorder %s16, 1
        %s124 = scalar_select %p123, %s16, 1
        %s125 = smul.addr %s124, 8
        %s126 = smul.addr %s125, 4
        %s127 = scalar_lea.vmem %s1, %s126
        %p128 = pneg %p58
        %p129 = pneg %p55
        %p130 = pneg %p84
        %p131 = pneg %p81
        %s132 = sand.u32 %s71, 1
        %s133 = scalar_lea.sflag [#allocation3], %s132
        %s134 = sand.u32 %s71, 1
        %s135 = smul.addr %s134, 16
        %s136 = scalar_lea.vmem [#allocation2], %s135
        %p137 = scmp.lt.s32.totalorder %s16, 1
        %s138 = scalar_select %p137, %s16, 1
        %s139 = smul.addr %s138, 8
        %s140 = smul.addr %s139, 4
        %s141 = scalar_lea.vmem %s1, %s140
        %v142 = vld [vmem:[%s141] sm:$0xf]
        %v143 = vld [vmem:[%s141 + $0x4] sm:$0xf]
        %v144 = vld [vmem:[%s141 + $0x8] sm:$0xf]
        %v145 = vld [vmem:[%s141 + $0xc] sm:$0xf]
        %v146 = vld [vmem:[%s141 + $0x10] sm:$0xf]
        %v147 = vld [vmem:[%s141 + $0x14] sm:$0xf]
        %v148 = vld [vmem:[%s141 + $0x18] sm:$0xf]
        %v149 = vld [vmem:[%s141 + $0x1c] sm:$0xf]
        %v150 = vunpack.c.l.bf16 %v142
        %v151 = vunpack.c.l.bf16 %v143
        %v152 = vunpack.c.l.bf16 %v144
        %v153 = vunpack.c.l.bf16 %v145
        %v154 = vunpack.c.l.bf16 %v146
        %v155 = vunpack.c.l.bf16 %v147
        %v156 = vunpack.c.l.bf16 %v148
        %v157 = vunpack.c.l.bf16 %v149
        %v158 = vld [vmem:[%s0] sm:$0xff]
        %v159 = vld [vmem:[%s0 + $0x8] sm:$0xff]
        %vm160 = vcmask 523264
        %v162 = vsel %vm160, %v158, 0
        %v165 = vsel %vm160, %v159, 0
        %167 = vmatprep.subr.mxu0 0.0
        %168 = vmatpush1.msra.mxu0 %v150
        %169 = vmatprep.subr.mxu0 0.0
        %170 = vmatpush1.msra.mxu0 %v151
        %171 = vmatprep.subr.mxu0 0.0
        %172 = vmatpush1.msra.mxu0 %v152
        %173 = vmatprep.subr.mxu0 0.0
        %174 = vmatpush1.msra.mxu0 %v153
        %175 = vmatprep.subr.mxu0 0.0
        %176 = vmatpush1.msra.mxu0 %v154
        %177 = vmatprep.subr.mxu0 0.0
        %178 = vmatpush1.msra.mxu0 %v155
        %179 = vmatprep.subr.mxu0 0.0
        %180 = vmatpush1.msra.mxu0 %v156
        %181 = vmatprep.subr.mxu0 0.0
        %182 = vmatpush1.msra.mxu0 %v157
        %183 = vmatprep.subr.mxu0 0.0
        %184 = vmatpush1.msra.mxu0 0.0
        %185 = vmatprep.subr.mxu0 0.0
        %186 = vmatpush1.msra.mxu0 0.0
        %187 = vmatprep.subr.mxu0 0.0
        %188 = vmatpush1.msra.mxu0 0.0
        %189 = vmatprep.subr.mxu0 0.0
        %190 = vmatpush1.msra.mxu0 0.0
        %191 = vmatprep.subr.mxu0 0.0
        %192 = vmatpush1.msra.mxu0 0.0
        %193 = vmatprep.subr.mxu0 0.0
        %194 = vmatpush1.msra.mxu0 0.0
        %195 = vmatprep.subr.mxu0 0.0
        %196 = vmatpush1.msra.mxu0 0.0
        %197 = vmatprep.subr.mxu0 0.0
        %198 = vmatpush1.msra.mxu0 0.0
        %199 = vmatprep.subr.mxu0 0.0
        %200 = vmatpush1.msra.mxu0 0.0
        %201 = vmatprep.subr.mxu0 0.0
        %202 = vmatpush1.msra.mxu0 0.0
        %203 = vmatprep.subr.mxu0 0.0
        %204 = vmatpush1.msra.mxu0 0.0
        %205 = vmatprep.subr.mxu0 0.0
        %206 = vmatpush1.msra.mxu0 0.0
        %207 = vmatprep.subr.mxu0 0.0
        %208 = vmatpush1.msra.mxu0 0.0
        %209 = vmatprep.subr.mxu0 0.0
        %210 = vmatpush1.msra.mxu0 0.0
        %211 = vmatprep.subr.mxu0 0.0
        %212 = vmatpush1.msra.mxu0 0.0
        %213 = vmatprep.subr.mxu0 0.0
        %214 = vmatpush1.msra.mxu0 0.0
        %215 = vmatprep.subr.mxu0 0.0
        %216 = vmatpush1.msra.mxu0 0.0
        %217 = vmatprep.subr.mxu0 0.0
        %218 = vmatpush1.msra.mxu0 0.0
        %219 = vmatprep.subr.mxu0 0.0
        %220 = vmatpush1.msra.mxu0 0.0
        %221 = vmatprep.subr.mxu0 0.0
        %222 = vmatpush1.msra.mxu0 0.0
        %223 = vmatprep.subr.mxu0 0.0
        %224 = vmatpush1.msra.mxu0 0.0
        %225 = vmatprep.subr.mxu0 0.0
        %226 = vmatpush1.msra.mxu0 0.0
        %227 = vmatprep.subr.mxu0 0.0
        %228 = vmatpush1.msra.mxu0 0.0
        %229 = vmatprep.subr.mxu0 0.0
        %230 = vmatpush1.msra.mxu0 0.0
        %231 = vmatprep.mubr.f32.mxu0 0.0
        %232 = vmatmul.mubr.f32.gmra.mrb[0].mxu0 %v162
        %v233 = vpop.f32.mrb[0].mxu0
        %v234 = vadd.f32 0.0, %v233
        %v235 = vpop.f32.mrb[0].mxu0
        %236 = vmatprep.mubr.f32.mxu0 0.0
        %237 = vmatmul.mubr.f32.gmra.mrb[0].mxu0 %v165
        %v238 = vpop.f32.mrb[0].mxu0
        %v239 = vadd.f32 0.0, %v238
        %v240 = vpop.f32.mrb[0].mxu0
        %241 = vdwg.mxu0
        %vm242 = vcmask 261120
        %243 = vst.msk [vmem:[%s136] sm:$0xff] %vm242, %v234
        %244 = vst.msk [vmem:[%s136 + $0x8] sm:$0xff] %vm242, %v239
        %s245 = sand.u32 %s71, 1
        %s246 = scalar_lea.sflag [#allocation3], %s245
        %s247 = sand.u32 %s71, 1
        %s248 = smul.addr %s247, 16
        %s249 = scalar_lea.vmem [#allocation2], %s248
        // Predicated region
        $region29: #{encoder_cnn_forward.5} parent=27 // pred_check
          %p250 = pneg %p81
        $region30: #{encoder_cnn_forward.5} parent=27 // pred_check_branch
          %252 = sbr.rel (%p250) target = $region32
        $region31: #{encoder_cnn_forward.5} parent=27 // pred_region
          %s254 = ssub.s32 256, 256
          %255 = vsyncadd %s246, %s254
          %s256 = smul.addr %s16, 2
          %s257 = smul.addr %s256, 128
          %s258 = scalar_lea.hbm %s2, %s257
          %s259 = sshll.u32 %s249, 4
          %s260 = int_to_ptr.vmem [resolvable:$true] %s259
          %265 = dma.vmem_to_hbm [thread:$0]  %s260, 256, %s258, %s246, 128, 128, 8
        $region32: #{encoder_cnn_forward.5} parent=27 // pred_fallthru
          _
      $region28: #{encoder_cnn_forward.5} parent=5 // pred_fallthru
        _
      %p266 = scmp.le.s32.totalorder 2, %s11
      // Predicated region
      $region33: #{encoder_cnn_forward.5} parent=5 // pred_check
        %p267 = pneg %p266
      $region34: #{encoder_cnn_forward.5} parent=5 // pred_check_branch
        %269 = sbr.rel (%p267) target = $region36
      $region35: #{encoder_cnn_forward.5} parent=5 // pred_region
        %s270 = ssub.s32 %s11, 2
        // Predicated region
        $region37: #{encoder_cnn_forward.5} parent=35 // pred_check
          %p271 = pneg %p87
        $region38: #{encoder_cnn_forward.5} parent=35 // pred_check_branch
          %273 = sbr.rel (%p271) target = $region40
        $region39: #{encoder_cnn_forward.5} parent=35 // pred_region
          %s274 = sand.u32 %s72, 1
          %s275 = scalar_lea.sflag [#allocation3], %s274
          %s276 = sand.u32 %s72, 1
          %s277 = smul.addr %s276, 16
          %s278 = scalar_lea.vmem [#allocation2], %s277
          %279 = dma.done %s275, 256
        $region40: #{encoder_cnn_forward.5} parent=35 // pred_fallthru
          _
      $region36: #{encoder_cnn_forward.5} parent=5 // pred_fallthru
        _
    $region6: #{encoder_cnn_forward.5} parent=1 // loop_footer
      %s15 = sadd.s32 1, %s11
    $region7: #{encoder_cnn_forward.5} parent=1 // loop_footer_branch
      %10 = sbr.rel target = $region3
    $region8: #{encoder_cnn_forward.5} parent=1 // loop_exit
      _
    %280 = vsyncpa [#allocation3], 1
    %s281 = scalar_lea.sflag [#allocation3], 1
    %282 = vsyncpa %s281, 1

</llo_original>
